<compile_context>
chip_gen: v7x
topology: tpu7x:2x2x1
jax: 0.10.0
libtpu: 0.0.40
codegen_flags: <defaults>
</compile_context>

<pallas_src>
import jax
import jax.numpy as jnp
from jax.experimental import pallas as pl
from jax.experimental.pallas import tpu as pltpu


def _mlp_kernel(e1_ref, e2_ref, e3_ref,
                w1_ref, b1_ref, w2_ref, b2_ref, w3_ref, b3_ref,
                o_ref):
    f32 = jnp.float32
    cd = w1_ref.dtype          # compute dtype (bf16); weights are pre-cast in the wrapper
    D = e1_ref.shape[1]

    # fc1, K-split along the concat axis -> no concatenated activation is ever formed.
    # The w1 slices are static and start at multiples of D (sublane-aligned) -> free views.
    h = (jnp.dot(e1_ref[...].astype(cd), w1_ref[pl.ds(0, D), :], preferred_element_type=f32)
         + jnp.dot(e2_ref[...].astype(cd), w1_ref[pl.ds(D, D), :], preferred_element_type=f32)
         + jnp.dot(e3_ref[...].astype(cd), w1_ref[pl.ds(2 * D, D), :], preferred_element_type=f32)
         + b1_ref[...])
    h = jnp.maximum(h, 0.0)

    # fc2 + ReLU (bf16 operands, f32 accumulation).
    h = jnp.dot(h.astype(cd), w2_ref[...], preferred_element_type=f32) + b2_ref[...]
    h = jnp.maximum(h, 0.0)

    # fc3 -> score.  The output is only B*4 bytes total, so the 1-lane stores of the (bt, 1)
    # tile are irrelevant next to the fc1 matmul; keep the module's (B, 1) layout.
    s = jnp.dot(h.astype(cd), w3_ref[...], preferred_element_type=f32) + b3_ref[...]
    o_ref[...] = s.astype(o_ref.dtype)


def _vmem_cap_bytes():
    cap = 64 << 20  # v7x per-TensorCore physical VMEM; safe everywhere
    try:
        phys = int(pltpu.get_tpu_info().vmem_capacity_bytes)
        if phys > cap:
            cap = min(phys - (4 << 20), 100 << 20)   # v5e/v6e: allow bigger tiles
    except Exception:
        pass
    return cap


def embedding2score_v3(e1, e2, e3, params, *, block_b=128, compute_dtype=jnp.bfloat16):
    """Pallas implementation of Embedding2Score_v3.forward."""
    w1, b1, w2, b2, w3, b3 = params
    B, D = e1.shape
    K, H = w1.shape
    assert K == 3 * D, (w1.shape, D)
    H2 = w2.shape[1]

    cd = jnp.dtype(compute_dtype)
    # Weights/biases are parameters: cast once wrapper-side (amortised across calls / jit).
    w1c = w1.astype(cd)
    w2c = w2.astype(cd)
    w3c = w3.astype(cd)
    b1f = b1.astype(jnp.float32).reshape(1, H)
    b2f = b2.astype(jnp.float32).reshape(1, H2)
    b3f = b3.astype(jnp.float32).reshape(1, 1)

    bt = min(block_b, B)
    grid = (pl.cdiv(B, bt),)

    w_item = cd.itemsize
    a_item = jnp.dtype(e1.dtype).itemsize
    weight_bytes = (3 * D * H + H * H2 + H2) * w_item + (H + H2 + 1) * 4
    act_tile_bytes = 3 * bt * D * a_item

    flops = 2 * B * (3 * D * H + H * H2 + H2)
    bytes_accessed = 3 * B * D * a_item + weight_bytes + B * 4
    cost = pl.CostEstimate(flops=flops, transcendentals=0, bytes_accessed=bytes_accessed)

    def act_spec(arr):
        return pl.BlockSpec((bt, arr.shape[1]), lambda i: (i, 0))

    vmem_cap = _vmem_cap_bytes()

    def run(single_buffer_weights):
        w_kwargs = {}
        if single_buffer_weights:
            # Weights are grid-invariant (constant index map): one buffer is enough; this
            # halves their resident VMEM (matters at the real 24 MiB bf16 fc1 weight).
            w_kwargs["pipeline_mode"] = pl.Buffered(1)

        def weight_spec(arr):
            # Constant index_map -> DMA'd once, stays resident across all batch tiles.
            return pl.BlockSpec(arr.shape, lambda i: (0, 0), **w_kwargs)

        wmult = 1 if single_buffer_weights else 2
        vmem_limit = (wmult * weight_bytes            # resident weights
                      + 2 * act_tile_bytes            # double-buffered f32 activation tiles
                      + 3 * bt * D * w_item           # in-kernel bf16 activation casts
                      + bt * (H + H2 + 1) * 4         # f32 intermediates
                      + (4 << 20))                    # headroom
        vmem_limit = int(min(max(vmem_limit, 16 << 20), vmem_cap))

        return pl.pallas_call(
            _mlp_kernel,
            out_shape=jax.ShapeDtypeStruct((B, 1), jnp.float32),
            grid=grid,
            in_specs=[
                act_spec(e1), act_spec(e2), act_spec(e3),
                weight_spec(w1c), weight_spec(b1f),
                weight_spec(w2c), weight_spec(b2f),
                weight_spec(w3c), weight_spec(b3f),
            ],
            out_specs=pl.BlockSpec((bt, 1), lambda i: (i, 0)),
            compiler_params=pltpu.CompilerParams(
                dimension_semantics=("parallel",),
                vmem_limit_bytes=vmem_limit),
            cost_estimate=cost,
        )(e1, e2, e3, w1c, b1f, w2c, b2f, w3c, b3f)

    if hasattr(pl, "Buffered"):
        try:
            return run(single_buffer_weights=True)
        except Exception:
            # Fallback for jax builds where Buffered(1) isn't accepted on pallas_call specs;
            # correctness is identical, weights are just double-buffered.
            pass
    return run(single_buffer_weights=False)


def init_params(key, input_dim, hidden_dim):
    """PyTorch-style uniform(+/- 1/sqrt(fan_in)) init; weights stored as (in, out)."""
    def linear_init(k, fan_in, fan_out):
        kw, kb = jax.random.split(k)
        bound = 1.0 / jnp.sqrt(fan_in)
        w = jax.random.uniform(kw, (fan_in, fan_out), jnp.float32, -bound, bound)
        b = jax.random.uniform(kb, (1, fan_out), jnp.float32, -bound, bound)
        return w, b

    k1, k2, k3 = jax.random.split(key, 3)
    w1, b1 = linear_init(k1, input_dim * 3, hidden_dim)
    w2, b2 = linear_init(k2, hidden_dim, hidden_dim // 2)
    w3, b3 = linear_init(k3, hidden_dim // 2, 1)
    return (w1, b1, w2, b2, w3, b3)


def reference(e1, e2, e3, params, compute_dtype=jnp.bfloat16):
    """Plain-JAX reference using the same bf16-operand / f32-accumulate numerics."""
    w1, b1, w2, b2, w3, b3 = params
    cd = compute_dtype
    x = jnp.concatenate([e1, e2, e3], axis=-1).astype(cd)
    h = jnp.maximum(jnp.dot(x, w1.astype(cd), preferred_element_type=jnp.float32)
                    + b1.reshape(1, -1), 0.0)
    h = jnp.maximum(jnp.dot(h.astype(cd), w2.astype(cd), preferred_element_type=jnp.float32)
                    + b2.reshape(1, -1), 0.0)
    return (jnp.dot(h.astype(cd), w3.astype(cd), preferred_element_type=jnp.float32)
            + b3.reshape(1, -1))


if __name__ == "__main__":
    # Small shapes consistent with the module's forward semantics.
    batch = 8
    input_dim = 32      # per-embedding feature dim (module default 4096)
    hidden_dim = 32     # module default 1024; hidden_dim // 2 = 16

    key = jax.random.PRNGKey(0)
    k_p, k1, k2, k3 = jax.random.split(key, 4)

    params = init_params(k_p, input_dim, hidden_dim)
    e1 = jax.random.normal(k1, (batch, input_dim), jnp.float32)
    e2 = jax.random.normal(k2, (batch, input_dim), jnp.float32)
    e3 = jax.random.normal(k3, (batch, input_dim), jnp.float32)

    score = embedding2score_v3(e1, e2, e3, params)
    score = jax.block_until_ready(score)

    ref = reference(e1, e2, e3, params)
    assert score.shape == (batch, 1), score.shape
    assert jnp.allclose(score, ref, atol=1e-2, rtol=1e-2), "mismatch vs reference"

    print("KERNEL_OK")
</pallas_src>

<mosaic_0001>
module attributes {stable_mosaic.version = 11 : i64} {
  func.func @_mlp_kernel(%arg0: i32, %arg1: memref<8x32xf32, #tpu.memory_space<vmem>>, %arg2: memref<8x32xf32, #tpu.memory_space<vmem>>, %arg3: memref<8x32xf32, #tpu.memory_space<vmem>>, %arg4: memref<96x32xbf16, #tpu.memory_space<vmem>>, %arg5: memref<1x32xf32, #tpu.memory_space<vmem>>, %arg6: memref<32x16xbf16, #tpu.memory_space<vmem>>, %arg7: memref<1x16xf32, #tpu.memory_space<vmem>>, %arg8: memref<16x1xbf16, #tpu.memory_space<vmem>>, %arg9: memref<1x1xf32, #tpu.memory_space<vmem>>, %arg10: memref<8x1xf32, #tpu.memory_space<vmem>>) attributes {dimension_semantics = [#tpu.dimension_semantics<parallel>], iteration_bounds = array<i64: 1>, scalar_prefetch = 0 : i64, scratch_operands = 0 : i64, tpu.core_type = #tpu.core_type<tc>, window_params = [{transform_indices = @transform_0, window_bounds = array<i64: 8, 32>}, {transform_indices = @transform_1, window_bounds = array<i64: 8, 32>}, {transform_indices = @transform_2, window_bounds = array<i64: 8, 32>}, {pipeline_mode = #tpu.pipeline_mode<synchronous>, transform_indices = @transform_3, window_bounds = array<i64: 96, 32>}, {pipeline_mode = #tpu.pipeline_mode<synchronous>, transform_indices = @transform_4, window_bounds = array<i64: 1, 32>}, {pipeline_mode = #tpu.pipeline_mode<synchronous>, transform_indices = @transform_5, window_bounds = array<i64: 32, 16>}, {pipeline_mode = #tpu.pipeline_mode<synchronous>, transform_indices = @transform_6, window_bounds = array<i64: 1, 16>}, {pipeline_mode = #tpu.pipeline_mode<synchronous>, transform_indices = @transform_7, window_bounds = array<i64: 16, 1>}, {pipeline_mode = #tpu.pipeline_mode<synchronous>, transform_indices = @transform_8, window_bounds = array<i64: 1, 1>}, {transform_indices = @transform_9, window_bounds = array<i64: 8, 1>}]} {
    %c0 = arith.constant 0 : index
    %c0_0 = arith.constant 0 : index
    %0 = vector.load %arg1[%c0, %c0_0] : memref<8x32xf32, #tpu.memory_space<vmem>>, vector<8x32xf32>
    %1 = arith.truncf %0 : vector<8x32xf32> to vector<8x32xbf16>
    %c0_1 = arith.constant 0 : index
    %c0_2 = arith.constant 0 : index
    %2 = vector.load %arg4[%c0_1, %c0_2] : memref<96x32xbf16, #tpu.memory_space<vmem>>, vector<32x32xbf16>
    %cst = arith.constant dense<0.000000e+00> : vector<8x32xf32>
    %3 = tpu.matmul %1, %2, %cst {dimension_numbers = #tpu.dot_dimension_numbers<[1], [0], [0], [1], [0, 0, 1, 1], [], []>} : vector<8x32xbf16>, vector<32x32xbf16>, vector<8x32xf32> -> vector<8x32xf32>
    %c0_3 = arith.constant 0 : index
    %c0_4 = arith.constant 0 : index
    %4 = vector.load %arg2[%c0_3, %c0_4] : memref<8x32xf32, #tpu.memory_space<vmem>>, vector<8x32xf32>
    %5 = arith.truncf %4 : vector<8x32xf32> to vector<8x32xbf16>
    %c32 = arith.constant 32 : index
    %c0_5 = arith.constant 0 : index
    %6 = vector.load %arg4[%c32, %c0_5] : memref<96x32xbf16, #tpu.memory_space<vmem>>, vector<32x32xbf16>
    %cst_6 = arith.constant dense<0.000000e+00> : vector<8x32xf32>
    %7 = tpu.matmul %5, %6, %cst_6 {dimension_numbers = #tpu.dot_dimension_numbers<[1], [0], [0], [1], [0, 0, 1, 1], [], []>} : vector<8x32xbf16>, vector<32x32xbf16>, vector<8x32xf32> -> vector<8x32xf32>
    %8 = arith.addf %3, %7 : vector<8x32xf32>
    %c0_7 = arith.constant 0 : index
    %c0_8 = arith.constant 0 : index
    %9 = vector.load %arg3[%c0_7, %c0_8] : memref<8x32xf32, #tpu.memory_space<vmem>>, vector<8x32xf32>
    %10 = arith.truncf %9 : vector<8x32xf32> to vector<8x32xbf16>
    %c64 = arith.constant 64 : index
    %c0_9 = arith.constant 0 : index
    %11 = vector.load %arg4[%c64, %c0_9] : memref<96x32xbf16, #tpu.memory_space<vmem>>, vector<32x32xbf16>
    %cst_10 = arith.constant dense<0.000000e+00> : vector<8x32xf32>
    %12 = tpu.matmul %10, %11, %cst_10 {dimension_numbers = #tpu.dot_dimension_numbers<[1], [0], [0], [1], [0, 0, 1, 1], [], []>} : vector<8x32xbf16>, vector<32x32xbf16>, vector<8x32xf32> -> vector<8x32xf32>
    %13 = arith.addf %8, %12 : vector<8x32xf32>
    %c0_11 = arith.constant 0 : index
    %c0_12 = arith.constant 0 : index
    %14 = vector.load %arg5[%c0_11, %c0_12] : memref<1x32xf32, #tpu.memory_space<vmem>>, vector<1x32xf32>
    %15 = vector.broadcast %14 : vector<1x32xf32> to vector<8x32xf32>
    %16 = arith.addf %13, %15 : vector<8x32xf32>
    %cst_13 = arith.constant 0.000000e+00 : f32
    %17 = vector.broadcast %cst_13 : f32 to vector<8x32xf32>
    %18 = arith.maximumf %16, %17 : vector<8x32xf32>
    %19 = arith.truncf %18 : vector<8x32xf32> to vector<8x32xbf16>
    %c0_14 = arith.constant 0 : index
    %c0_15 = arith.constant 0 : index
    %20 = vector.load %arg6[%c0_14, %c0_15] : memref<32x16xbf16, #tpu.memory_space<vmem>>, vector<32x16xbf16>
    %cst_16 = arith.constant dense<0.000000e+00> : vector<8x16xf32>
    %21 = tpu.matmul %19, %20, %cst_16 {dimension_numbers = #tpu.dot_dimension_numbers<[1], [0], [0], [1], [0, 0, 1, 1], [], []>} : vector<8x32xbf16>, vector<32x16xbf16>, vector<8x16xf32> -> vector<8x16xf32>
    %c0_17 = arith.constant 0 : index
    %c0_18 = arith.constant 0 : index
    %22 = vector.load %arg7[%c0_17, %c0_18] : memref<1x16xf32, #tpu.memory_space<vmem>>, vector<1x16xf32>
    %23 = vector.broadcast %22 : vector<1x16xf32> to vector<8x16xf32>
    %24 = arith.addf %21, %23 : vector<8x16xf32>
    %cst_19 = arith.constant 0.000000e+00 : f32
    %25 = vector.broadcast %cst_19 : f32 to vector<8x16xf32>
    %26 = arith.maximumf %24, %25 : vector<8x16xf32>
    %27 = arith.truncf %26 : vector<8x16xf32> to vector<8x16xbf16>
    %c0_20 = arith.constant 0 : index
    %c0_21 = arith.constant 0 : index
    %28 = vector.load %arg8[%c0_20, %c0_21] : memref<16x1xbf16, #tpu.memory_space<vmem>>, vector<16x1xbf16>
    %cst_22 = arith.constant dense<0.000000e+00> : vector<8x1xf32>
    %29 = tpu.matmul %27, %28, %cst_22 {dimension_numbers = #tpu.dot_dimension_numbers<[1], [0], [0], [1], [0, 0, 1, 1], [], []>} : vector<8x16xbf16>, vector<16x1xbf16>, vector<8x1xf32> -> vector<8x1xf32>
    %c0_23 = arith.constant 0 : index
    %c0_24 = arith.constant 0 : index
    %30 = vector.load %arg9[%c0_23, %c0_24] : memref<1x1xf32, #tpu.memory_space<vmem>>, vector<1x1xf32>
    %31 = vector.broadcast %30 : vector<1x1xf32> to vector<8x1xf32>
    %32 = arith.addf %29, %31 : vector<8x1xf32>
    %c0_25 = arith.constant 0 : index
    %c0_26 = arith.constant 0 : index
    %33 = vector.load %arg10[%c0_25, %c0_26] : memref<8x1xf32, #tpu.memory_space<vmem>>, vector<8x1xf32>
    tpu.vector_store %arg10[%c0_25, %c0_26], %32 {strides = array<i32>} : memref<8x1xf32, #tpu.memory_space<vmem>>, vector<8x1xf32>,
    return
  }
  func.func @transform_0(%arg0: i32) -> (i32, i32) {
    %c0_i32 = arith.constant 0 : i32
    %c0_i32_0 = arith.constant 0 : i32
    return %arg0, %c0_i32 : i32, i32
  }
  func.func @transform_1(%arg0: i32) -> (i32, i32) {
    %c0_i32 = arith.constant 0 : i32
    %c0_i32_0 = arith.constant 0 : i32
    return %arg0, %c0_i32 : i32, i32
  }
  func.func @transform_2(%arg0: i32) -> (i32, i32) {
    %c0_i32 = arith.constant 0 : i32
    %c0_i32_0 = arith.constant 0 : i32
    return %arg0, %c0_i32 : i32, i32
  }
  func.func @transform_3(%arg0: i32) -> (i32, i32) {
    %c0_i32 = arith.constant 0 : i32
    %c0_i32_0 = arith.constant 0 : i32
    %c0_i32_1 = arith.constant 0 : i32
    return %c0_i32, %c0_i32_0 : i32, i32
  }
  func.func @transform_4(%arg0: i32) -> (i32, i32) {
    %c0_i32 = arith.constant 0 : i32
    %c0_i32_0 = arith.constant 0 : i32
    %c0_i32_1 = arith.constant 0 : i32
    return %c0_i32, %c0_i32_0 : i32, i32
  }
  func.func @transform_5(%arg0: i32) -> (i32, i32) {
    %c0_i32 = arith.constant 0 : i32
    %c0_i32_0 = arith.constant 0 : i32
    %c0_i32_1 = arith.constant 0 : i32
    return %c0_i32, %c0_i32_0 : i32, i32
  }
  func.func @transform_6(%arg0: i32) -> (i32, i32) {
    %c0_i32 = arith.constant 0 : i32
    %c0_i32_0 = arith.constant 0 : i32
    %c0_i32_1 = arith.constant 0 : i32
    return %c0_i32, %c0_i32_0 : i32, i32
  }
  func.func @transform_7(%arg0: i32) -> (i32, i32) {
    %c0_i32 = arith.constant 0 : i32
    %c0_i32_0 = arith.constant 0 : i32
    %c0_i32_1 = arith.constant 0 : i32
    return %c0_i32, %c0_i32_0 : i32, i32
  }
  func.func @transform_8(%arg0: i32) -> (i32, i32) {
    %c0_i32 = arith.constant 0 : i32
    %c0_i32_0 = arith.constant 0 : i32
    %c0_i32_1 = arith.constant 0 : i32
    return %c0_i32, %c0_i32_0 : i32, i32
  }
  func.func @transform_9(%arg0: i32) -> (i32, i32) {
    %c0_i32 = arith.constant 0 : i32
    %c0_i32_0 = arith.constant 0 : i32
    return %arg0, %c0_i32 : i32, i32
  }
}

module attributes {stable_mosaic.version = 11 : i64} {
  func.func @_mlp_kernel(%arg0: i32, %arg1: memref<8x32xf32, #tpu.memory_space<vmem>>, %arg2: memref<8x32xf32, #tpu.memory_space<vmem>>, %arg3: memref<8x32xf32, #tpu.memory_space<vmem>>, %arg4: memref<96x32xbf16, #tpu.memory_space<vmem>>, %arg5: memref<1x32xf32, #tpu.memory_space<vmem>>, %arg6: memref<32x16xbf16, #tpu.memory_space<vmem>>, %arg7: memref<1x16xf32, #tpu.memory_space<vmem>>, %arg8: memref<16x1xbf16, #tpu.memory_space<vmem>>, %arg9: memref<1x1xf32, #tpu.memory_space<vmem>>, %arg10: memref<8x1xf32, #tpu.memory_space<vmem>>) attributes {dimension_semantics = [#tpu.dimension_semantics<parallel>], iteration_bounds = array<i64: 1>, scalar_prefetch = 0 : i64, scratch_operands = 0 : i64, tpu.core_type = #tpu.core_type<tc>, window_params = [{transform_indices = @transform_0, window_bounds = array<i64: 8, 32>}, {transform_indices = @transform_1, window_bounds = array<i64: 8, 32>}, {transform_indices = @transform_2, window_bounds = array<i64: 8, 32>}, {pipeline_mode = #tpu.pipeline_mode<synchronous>, transform_indices = @transform_3, window_bounds = array<i64: 96, 32>}, {pipeline_mode = #tpu.pipeline_mode<synchronous>, transform_indices = @transform_4, window_bounds = array<i64: 1, 32>}, {pipeline_mode = #tpu.pipeline_mode<synchronous>, transform_indices = @transform_5, window_bounds = array<i64: 32, 16>}, {pipeline_mode = #tpu.pipeline_mode<synchronous>, transform_indices = @transform_6, window_bounds = array<i64: 1, 16>}, {pipeline_mode = #tpu.pipeline_mode<synchronous>, transform_indices = @transform_7, window_bounds = array<i64: 16, 1>}, {pipeline_mode = #tpu.pipeline_mode<synchronous>, transform_indices = @transform_8, window_bounds = array<i64: 1, 1>}, {transform_indices = @transform_9, window_bounds = array<i64: 8, 1>}]} {
    %c0 = arith.constant 0 : index
    %c0_0 = arith.constant 0 : index
    %0 = vector.load %arg1[%c0, %c0_0] : memref<8x32xf32, #tpu.memory_space<vmem>>, vector<8x32xf32>
    %1 = arith.truncf %0 : vector<8x32xf32> to vector<8x32xbf16>
    %c0_1 = arith.constant 0 : index
    %c0_2 = arith.constant 0 : index
    %2 = vector.load %arg4[%c0_1, %c0_2] : memref<96x32xbf16, #tpu.memory_space<vmem>>, vector<32x32xbf16>
    %cst = arith.constant dense<0.000000e+00> : vector<8x32xf32>
    %3 = tpu.matmul %1, %2, %cst {dimension_numbers = #tpu.dot_dimension_numbers<[1], [0], [0], [1], [0, 0, 1, 1], [], []>} : vector<8x32xbf16>, vector<32x32xbf16>, vector<8x32xf32> -> vector<8x32xf32>
    %c0_3 = arith.constant 0 : index
    %c0_4 = arith.constant 0 : index
    %4 = vector.load %arg2[%c0_3, %c0_4] : memref<8x32xf32, #tpu.memory_space<vmem>>, vector<8x32xf32>
    %5 = arith.truncf %4 : vector<8x32xf32> to vector<8x32xbf16>
    %c32 = arith.constant 32 : index
    %c0_5 = arith.constant 0 : index
    %6 = vector.load %arg4[%c32, %c0_5] : memref<96x32xbf16, #tpu.memory_space<vmem>>, vector<32x32xbf16>
    %cst_6 = arith.constant dense<0.000000e+00> : vector<8x32xf32>
    %7 = tpu.matmul %5, %6, %cst_6 {dimension_numbers = #tpu.dot_dimension_numbers<[1], [0], [0], [1], [0, 0, 1, 1], [], []>} : vector<8x32xbf16>, vector<32x32xbf16>, vector<8x32xf32> -> vector<8x32xf32>
    %8 = arith.addf %3, %7 : vector<8x32xf32>
    %c0_7 = arith.constant 0 : index
    %c0_8 = arith.constant 0 : index
    %9 = vector.load %arg3[%c0_7, %c0_8] : memref<8x32xf32, #tpu.memory_space<vmem>>, vector<8x32xf32>
    %10 = arith.truncf %9 : vector<8x32xf32> to vector<8x32xbf16>
    %c64 = arith.constant 64 : index
    %c0_9 = arith.constant 0 : index
    %11 = vector.load %arg4[%c64, %c0_9] : memref<96x32xbf16, #tpu.memory_space<vmem>>, vector<32x32xbf16>
    %cst_10 = arith.constant dense<0.000000e+00> : vector<8x32xf32>
    %12 = tpu.matmul %10, %11, %cst_10 {dimension_numbers = #tpu.dot_dimension_numbers<[1], [0], [0], [1], [0, 0, 1, 1], [], []>} : vector<8x32xbf16>, vector<32x32xbf16>, vector<8x32xf32> -> vector<8x32xf32>
    %13 = arith.addf %8, %12 : vector<8x32xf32>
    %c0_11 = arith.constant 0 : index
    %c0_12 = arith.constant 0 : index
    %14 = vector.load %arg5[%c0_11, %c0_12] : memref<1x32xf32, #tpu.memory_space<vmem>>, vector<1x32xf32>
    %15 = vector.broadcast %14 : vector<1x32xf32> to vector<8x32xf32>
    %16 = arith.addf %13, %15 : vector<8x32xf32>
    %cst_13 = arith.constant 0.000000e+00 : f32
    %17 = vector.broadcast %cst_13 : f32 to vector<8x32xf32>
    %18 = arith.maximumf %16, %17 : vector<8x32xf32>
    %19 = arith.truncf %18 : vector<8x32xf32> to vector<8x32xbf16>
    %c0_14 = arith.constant 0 : index
    %c0_15 = arith.constant 0 : index
    %20 = vector.load %arg6[%c0_14, %c0_15] : memref<32x16xbf16, #tpu.memory_space<vmem>>, vector<32x16xbf16>
    %cst_16 = arith.constant dense<0.000000e+00> : vector<8x16xf32>
    %21 = tpu.matmul %19, %20, %cst_16 {dimension_numbers = #tpu.dot_dimension_numbers<[1], [0], [0], [1], [0, 0, 1, 1], [], []>} : vector<8x32xbf16>, vector<32x16xbf16>, vector<8x16xf32> -> vector<8x16xf32>
    %c0_17 = arith.constant 0 : index
    %c0_18 = arith.constant 0 : index
    %22 = vector.load %arg7[%c0_17, %c0_18] : memref<1x16xf32, #tpu.memory_space<vmem>>, vector<1x16xf32>
    %23 = vector.broadcast %22 : vector<1x16xf32> to vector<8x16xf32>
    %24 = arith.addf %21, %23 : vector<8x16xf32>
    %cst_19 = arith.constant 0.000000e+00 : f32
    %25 = vector.broadcast %cst_19 : f32 to vector<8x16xf32>
    %26 = arith.maximumf %24, %25 : vector<8x16xf32>
    %27 = arith.truncf %26 : vector<8x16xf32> to vector<8x16xbf16>
    %c0_20 = arith.constant 0 : index
    %c0_21 = arith.constant 0 : index
    %28 = vector.load %arg8[%c0_20, %c0_21] : memref<16x1xbf16, #tpu.memory_space<vmem>>, vector<16x1xbf16>
    %cst_22 = arith.constant dense<0.000000e+00> : vector<8x1xf32>
    %29 = tpu.matmul %27, %28, %cst_22 {dimension_numbers = #tpu.dot_dimension_numbers<[1], [0], [0], [1], [0, 0, 1, 1], [], []>} : vector<8x16xbf16>, vector<16x1xbf16>, vector<8x1xf32> -> vector<8x1xf32>
    %c0_23 = arith.constant 0 : index
    %c0_24 = arith.constant 0 : index
    %30 = vector.load %arg9[%c0_23, %c0_24] : memref<1x1xf32, #tpu.memory_space<vmem>>, vector<1x1xf32>
    %31 = vector.broadcast %30 : vector<1x1xf32> to vector<8x1xf32>
    %32 = arith.addf %29, %31 : vector<8x1xf32>
    %c0_25 = arith.constant 0 : index
    %c0_26 = arith.constant 0 : index
    %33 = vector.load %arg10[%c0_25, %c0_26] : memref<8x1xf32, #tpu.memory_space<vmem>>, vector<8x1xf32>
    tpu.vector_store %arg10[%c0_25, %c0_26], %32 {strides = array<i32>} : memref<8x1xf32, #tpu.memory_space<vmem>>, vector<8x1xf32>,
    return
  }
  func.func @transform_0(%arg0: i32) -> (i32, i32) {
    %c0_i32 = arith.constant 0 : i32
    %c0_i32_0 = arith.constant 0 : i32
    return %arg0, %c0_i32 : i32, i32
  }
  func.func @transform_1(%arg0: i32) -> (i32, i32) {
    %c0_i32 = arith.constant 0 : i32
    %c0_i32_0 = arith.constant 0 : i32
    return %arg0, %c0_i32 : i32, i32
  }
  func.func @transform_2(%arg0: i32) -> (i32, i32) {
    %c0_i32 = arith.constant 0 : i32
    %c0_i32_0 = arith.constant 0 : i32
    return %arg0, %c0_i32 : i32, i32
  }
  func.func @transform_3(%arg0: i32) -> (i32, i32) {
    %c0_i32 = arith.constant 0 : i32
    %c0_i32_0 = arith.constant 0 : i32
    %c0_i32_1 = arith.constant 0 : i32
    return %c0_i32, %c0_i32_0 : i32, i32
  }
  func.func @transform_4(%arg0: i32) -> (i32, i32) {
    %c0_i32 = arith.constant 0 : i32
    %c0_i32_0 = arith.constant 0 : i32
    %c0_i32_1 = arith.constant 0 : i32
    return %c0_i32, %c0_i32_0 : i32, i32
  }
  func.func @transform_5(%arg0: i32) -> (i32, i32) {
    %c0_i32 = arith.constant 0 : i32
    %c0_i32_0 = arith.constant 0 : i32
    %c0_i32_1 = arith.constant 0 : i32
    return %c0_i32, %c0_i32_0 : i32, i32
  }
  func.func @transform_6(%arg0: i32) -> (i32, i32) {
    %c0_i32 = arith.constant 0 : i32
    %c0_i32_0 = arith.constant 0 : i32
    %c0_i32_1 = arith.constant 0 : i32
    return %c0_i32, %c0_i32_0 : i32, i32
  }
  func.func @transform_7(%arg0: i32) -> (i32, i32) {
    %c0_i32 = arith.constant 0 : i32
    %c0_i32_0 = arith.constant 0 : i32
    %c0_i32_1 = arith.constant 0 : i32
    return %c0_i32, %c0_i32_0 : i32, i32
  }
  func.func @transform_8(%arg0: i32) -> (i32, i32) {
    %c0_i32 = arith.constant 0 : i32
    %c0_i32_0 = arith.constant 0 : i32
    %c0_i32_1 = arith.constant 0 : i32
    return %c0_i32, %c0_i32_0 : i32, i32
  }
  func.func @transform_9(%arg0: i32) -> (i32, i32) {
    %c0_i32 = arith.constant 0 : i32
    %c0_i32_0 = arith.constant 0 : i32
    return %arg0, %c0_i32 : i32, i32
  }
}

</mosaic_0001>

<llo_original>
// kernel: tpu_custom_call.1
$region0: #{tpu_custom_call.1}
  #allocation0 [shape = 'u32[]', space=smem, size = 0x4, offset = 0x4, fixed_abs, tag = 'smem constant byte address 0x4 - core index']
  #allocation1 [shape = 'u32[144,128]{1,0:T(1,128)}', space=vmem, size = 0x12000, scoped, tag = 'internal scratch']
  #allocation2 [shape = 'f32[1,1]{1,0:T(1,128)S(1)}', space=vmem, size = 0x200, scoped, tag = 'scoped memory for tpu_custom_call.1']
  %s0 = inlined_call_operand.vmem [shape: f32[8,32], index: 0, kind: input, shape index: {}]
  %s1 = inlined_call_operand.vmem [shape: f32[8,32], index: 1, kind: input, shape index: {}]
  %s2 = inlined_call_operand.vmem [shape: f32[8,32], index: 2, kind: input, shape index: {}]
  %s3 = inlined_call_operand.vmem [shape: bf16[96,32], index: 3, kind: input, shape index: {}]
  %s4 = inlined_call_operand.vmem [shape: f32[1,32], index: 4, kind: input, shape index: {}]
  %s5 = inlined_call_operand.vmem [shape: bf16[32,16], index: 5, kind: input, shape index: {}]
  %s6 = inlined_call_operand.vmem [shape: f32[1,16], index: 6, kind: input, shape index: {}]
  %s7 = inlined_call_operand.vmem [shape: bf16[16,1], index: 7, kind: input, shape index: {}]
  %s8 = inlined_call_operand.<no memory space> [shape: f32[1,1], index: 8, kind: input, shape index: {}]
  %s9 = inlined_call_operand.vmem [shape: f32[8,1], index: 9, kind: output, shape index: {}]
  %s10 = sld [smem:[#allocation0]]
  $region46: #{tpu_custom_call.1} parent=0
    _
  %s12 = ssub.s32 1, %s10
  %s13 = scalar_select 0, %s12, %s10
  %v14 = vstv %s8
  %15 = vst [vmem:[#allocation2] sm:$0x1] %v14
  // Predicated region
  $region2: #{tpu_custom_call.1} parent=0 // pred_check
    _
  $region3: #{tpu_custom_call.1} parent=0 // pred_check_branch
    %17 = sbr.rel (0) target = $region5
  $region4: #{tpu_custom_call.1} parent=0 // pred_region
    _
  $region5: #{tpu_custom_call.1} parent=0 // pred_fallthru
    _
  // Predicated region
  $region6: #{tpu_custom_call.1} parent=0 // pred_check
    _
  $region7: #{tpu_custom_call.1} parent=0 // pred_check_branch
    %19 = sbr.rel (0) target = $region9
  $region8: #{tpu_custom_call.1} parent=0 // pred_region
    _
  $region9: #{tpu_custom_call.1} parent=0 // pred_fallthru
    _
  // Predicated region
  $region10: #{tpu_custom_call.1} parent=0 // pred_check
    _
  $region11: #{tpu_custom_call.1} parent=0 // pred_check_branch
    %21 = sbr.rel (0) target = $region13
  $region12: #{tpu_custom_call.1} parent=0 // pred_region
    _
  $region13: #{tpu_custom_call.1} parent=0 // pred_fallthru
    _
  // Predicated region
  $region14: #{tpu_custom_call.1} parent=0 // pred_check
    _
  $region15: #{tpu_custom_call.1} parent=0 // pred_check_branch
    %23 = sbr.rel (0) target = $region17
  $region16: #{tpu_custom_call.1} parent=0 // pred_region
    _
  $region17: #{tpu_custom_call.1} parent=0 // pred_fallthru
    _
  // Predicated region
  $region18: #{tpu_custom_call.1} parent=0 // pred_check
    _
  $region19: #{tpu_custom_call.1} parent=0 // pred_check_branch
    %25 = sbr.rel (0) target = $region21
  $region20: #{tpu_custom_call.1} parent=0 // pred_region
    _
  $region21: #{tpu_custom_call.1} parent=0 // pred_fallthru
    _
  // Predicated region
  $region22: #{tpu_custom_call.1} parent=0 // pred_check
    _
  $region23: #{tpu_custom_call.1} parent=0 // pred_check_branch
    %27 = sbr.rel (0) target = $region25
  $region24: #{tpu_custom_call.1} parent=0 // pred_region
    _
  $region25: #{tpu_custom_call.1} parent=0 // pred_fallthru
    _
  // Predicated region
  $region26: #{tpu_custom_call.1} parent=0 // pred_check
    _
  $region27: #{tpu_custom_call.1} parent=0 // pred_check_branch
    %29 = sbr.rel (0) target = $region29
  $region28: #{tpu_custom_call.1} parent=0 // pred_region
    _
  $region29: #{tpu_custom_call.1} parent=0 // pred_fallthru
    _
  // Predicated region
  $region30: #{tpu_custom_call.1} parent=0 // pred_check
    _
  $region31: #{tpu_custom_call.1} parent=0 // pred_check_branch
    %31 = sbr.rel (0) target = $region33
  $region32: #{tpu_custom_call.1} parent=0 // pred_region
    _
  $region33: #{tpu_custom_call.1} parent=0 // pred_fallthru
    _
  // Predicated region
  $region34: #{tpu_custom_call.1} parent=0 // pred_check
    _
  $region35: #{tpu_custom_call.1} parent=0 // pred_check_branch
    %33 = sbr.rel (0) target = $region37
  $region36: #{tpu_custom_call.1} parent=0 // pred_region
    _
  $region37: #{tpu_custom_call.1} parent=0 // pred_fallthru
    _
  %v35 = vld [vmem:[%s0] sm:$0xff]
  %v36 = vpack.c.bf16 %v35, %v35
  %v37 = vld [vmem:[%s3] sm:$0xf]
  %v38 = vld [vmem:[%s3 + $0x4] sm:$0xf]
  %v39 = vld [vmem:[%s3 + $0x8] sm:$0xf]
  %v40 = vld [vmem:[%s3 + $0xc] sm:$0xf]
  %v41 = vld [vmem:[%s1] sm:$0xff]
  %v42 = vpack.c.bf16 %v41, %v41
  %v43 = vld [vmem:[%s3 + $0x10] sm:$0xf]
  %v44 = vld [vmem:[%s3 + $0x14] sm:$0xf]
  %v45 = vld [vmem:[%s3 + $0x18] sm:$0xf]
  %v46 = vld [vmem:[%s3 + $0x1c] sm:$0xf]
  %v51 = vunpack.c.l.b16 %v43
  %v52 = vunpack.c.l.b16 %v44
  %v53 = vunpack.c.l.b16 %v45
  %v54 = vunpack.c.l.b16 %v46
  %v55 = vpack.c.b16 %v52, %v51
  %v56 = vpack.c.b16 %v54, %v53
  %vm59 = vcmask 261120
  %v61 = vsel %vm59, %v42, 0
  %63 = vmatprep.subr.bf16.mxu0 0
  %64 = vmatpush1.bf16.msra.mxu0 %v55
  %65 = vmatprep.subr.bf16.mxu0 0
  %66 = vmatpush1.bf16.msra.mxu0 %v56
  %67 = vmatprep.subr.bf16.mxu0 0
  %68 = vmatpush1.bf16.msra.mxu0 0
  %69 = vmatprep.subr.bf16.mxu0 0
  %70 = vmatpush1.bf16.msra.mxu0 0
  %71 = vmatprep.subr.bf16.mxu0 0
  %72 = vmatpush1.bf16.msra.mxu0 0
  %73 = vmatprep.subr.bf16.mxu0 0
  %74 = vmatpush1.bf16.msra.mxu0 0
  %75 = vmatprep.subr.bf16.mxu0 0
  %76 = vmatpush1.bf16.msra.mxu0 0
  %77 = vmatprep.subr.bf16.mxu0 0
  %78 = vmatpush1.bf16.msra.mxu0 0
  %79 = vmatprep.subr.bf16.mxu0 0
  %80 = vmatpush1.bf16.msra.mxu0 0
  %81 = vmatprep.subr.bf16.mxu0 0
  %82 = vmatpush1.bf16.msra.mxu0 0
  %83 = vmatprep.subr.bf16.mxu0 0
  %84 = vmatpush1.bf16.msra.mxu0 0
  %85 = vmatprep.subr.bf16.mxu0 0
  %86 = vmatpush1.bf16.msra.mxu0 0
  %87 = vmatprep.subr.bf16.mxu0 0
  %88 = vmatpush1.bf16.msra.mxu0 0
  %89 = vmatprep.subr.bf16.mxu0 0
  %90 = vmatpush1.bf16.msra.mxu0 0
  %91 = vmatprep.subr.bf16.mxu0 0
  %92 = vmatpush1.bf16.msra.mxu0 0
  %93 = vmatprep.subr.bf16.mxu0 0
  %94 = vmatpush1.bf16.msra.mxu0 0
  %95 = vmatprep.mubr.bf16.mxu0 0
  %96 = vmatmul.mubr.bf16.gmra.mrb[0].mxu0 %v61
  %v97 = vpop.f32.mrb[0].mxu0
  %v98 = vadd.f32 0.0, %v97
  %v99 = vpop.f32.mrb[0].mxu0
  %v100 = vpop.f32.mrb[0].mxu0
  %v101 = vpop.f32.mrb[0].mxu0
  %102 = vdwg.mxu0
  %v107 = vunpack.c.l.b16 %v37
  %v108 = vunpack.c.l.b16 %v38
  %v109 = vunpack.c.l.b16 %v39
  %v110 = vunpack.c.l.b16 %v40
  %v111 = vpack.c.b16 %v108, %v107
  %v112 = vpack.c.b16 %v110, %v109
  %v116 = vsel %vm59, %v36, 0
  %118 = vmatprep.subr.bf16.mxu0 0
  %119 = vmatpush1.bf16.msra.mxu0 %v111
  %120 = vmatprep.subr.bf16.mxu0 0
  %121 = vmatpush1.bf16.msra.mxu0 %v112
  %122 = vmatprep.subr.bf16.mxu0 0
  %123 = vmatpush1.bf16.msra.mxu0 0
  %124 = vmatprep.subr.bf16.mxu0 0
  %125 = vmatpush1.bf16.msra.mxu0 0
  %126 = vmatprep.subr.bf16.mxu0 0
  %127 = vmatpush1.bf16.msra.mxu0 0
  %128 = vmatprep.subr.bf16.mxu0 0
  %129 = vmatpush1.bf16.msra.mxu0 0
  %130 = vmatprep.subr.bf16.mxu0 0
  %131 = vmatpush1.bf16.msra.mxu0 0
  %132 = vmatprep.subr.bf16.mxu0 0
  %133 = vmatpush1.bf16.msra.mxu0 0
  %134 = vmatprep.subr.bf16.mxu0 0
  %135 = vmatpush1.bf16.msra.mxu0 0
  %136 = vmatprep.subr.bf16.mxu0 0
  %137 = vmatpush1.bf16.msra.mxu0 0
  %138 = vmatprep.subr.bf16.mxu0 0
  %139 = vmatpush1.bf16.msra.mxu0 0
  %140 = vmatprep.subr.bf16.mxu0 0
  %141 = vmatpush1.bf16.msra.mxu0 0
  %142 = vmatprep.subr.bf16.mxu0 0
  %143 = vmatpush1.bf16.msra.mxu0 0
  %144 = vmatprep.subr.bf16.mxu0 0
  %145 = vmatpush1.bf16.msra.mxu0 0
  %146 = vmatprep.subr.bf16.mxu0 0
  %147 = vmatpush1.bf16.msra.mxu0 0
  %148 = vmatprep.subr.bf16.mxu0 0
  %149 = vmatpush1.bf16.msra.mxu0 0
  %150 = vmatprep.mubr.bf16.mxu0 0
  %151 = vmatmul.mubr.bf16.gmra.mrb[0].mxu0 %v116
  %v152 = vpop.f32.mrb[0].mxu0
  %v153 = vadd.f32 %v98, %v152
  %v154 = vpop.f32.mrb[0].mxu0
  %v155 = vpop.f32.mrb[0].mxu0
  %v156 = vpop.f32.mrb[0].mxu0
  %157 = vdwg.mxu0
  %v158 = vld [vmem:[%s2] sm:$0xff]
  %v159 = vpack.c.bf16 %v158, %v158
  %v160 = vld [vmem:[%s3 + $0x20] sm:$0xf]
  %v161 = vld [vmem:[%s3 + $0x24] sm:$0xf]
  %v162 = vld [vmem:[%s3 + $0x28] sm:$0xf]
  %v163 = vld [vmem:[%s3 + $0x2c] sm:$0xf]
  %v168 = vunpack.c.l.b16 %v160
  %v169 = vunpack.c.l.b16 %v161
  %v170 = vunpack.c.l.b16 %v162
  %v171 = vunpack.c.l.b16 %v163
  %v172 = vpack.c.b16 %v169, %v168
  %v173 = vpack.c.b16 %v171, %v170
  %v177 = vsel %vm59, %v159, 0
  %179 = vmatprep.subr.bf16.mxu0 0
  %180 = vmatpush1.bf16.msra.mxu0 %v172
  %181 = vmatprep.subr.bf16.mxu0 0
  %182 = vmatpush1.bf16.msra.mxu0 %v173
  %183 = vmatprep.subr.bf16.mxu0 0
  %184 = vmatpush1.bf16.msra.mxu0 0
  %185 = vmatprep.subr.bf16.mxu0 0
  %186 = vmatpush1.bf16.msra.mxu0 0
  %187 = vmatprep.subr.bf16.mxu0 0
  %188 = vmatpush1.bf16.msra.mxu0 0
  %189 = vmatprep.subr.bf16.mxu0 0
  %190 = vmatpush1.bf16.msra.mxu0 0
  %191 = vmatprep.subr.bf16.mxu0 0
  %192 = vmatpush1.bf16.msra.mxu0 0
  %193 = vmatprep.subr.bf16.mxu0 0
  %194 = vmatpush1.bf16.msra.mxu0 0
  %195 = vmatprep.subr.bf16.mxu0 0
  %196 = vmatpush1.bf16.msra.mxu0 0
  %197 = vmatprep.subr.bf16.mxu0 0
  %198 = vmatpush1.bf16.msra.mxu0 0
  %199 = vmatprep.subr.bf16.mxu0 0
  %200 = vmatpush1.bf16.msra.mxu0 0
  %201 = vmatprep.subr.bf16.mxu0 0
  %202 = vmatpush1.bf16.msra.mxu0 0
  %203 = vmatprep.subr.bf16.mxu0 0
  %204 = vmatpush1.bf16.msra.mxu0 0
  %205 = vmatprep.subr.bf16.mxu0 0
  %206 = vmatpush1.bf16.msra.mxu0 0
  %207 = vmatprep.subr.bf16.mxu0 0
  %208 = vmatpush1.bf16.msra.mxu0 0
  %209 = vmatprep.subr.bf16.mxu0 0
  %210 = vmatpush1.bf16.msra.mxu0 0
  %211 = vmatprep.mubr.bf16.mxu0 0
  %212 = vmatmul.mubr.bf16.gmra.mrb[0].mxu0 %v177
  %v213 = vpop.f32.mrb[0].mxu0
  %v214 = vadd.f32 0.0, %v213
  %v215 = vpop.f32.mrb[0].mxu0
  %v216 = vpop.f32.mrb[0].mxu0
  %v217 = vpop.f32.mrb[0].mxu0
  %218 = vdwg.mxu0
  %v219 = vadd.f32 %v153, %v214
  %v220 = vld [vmem:[%s4] sm:$0x1]
  %v222 = vlaneseq
  %v223 = vshrl.u32 %v222, 7
  %v224 = vsub.s32 0, %v223
  %v225 = vrot.slane %v220, %v224
  %v227 = vadd.f32 %v219, %v225
  %v228 = vmax.f32 %v227, 0.0
  %v229 = vpack.c.bf16 %v228, %v228
  %v230 = vld [vmem:[%s5] sm:$0xf]
  %v231 = vld [vmem:[%s5 + $0x4] sm:$0xf]
  %v232 = vld [vmem:[%s5 + $0x8] sm:$0xf]
  %v233 = vld [vmem:[%s5 + $0xc] sm:$0xf]
  %v234 = vld [vmem:[%s6] sm:$0x1]
  %v236 = vlaneseq
  %v237 = vshrl.u32 %v236, 7
  %v238 = vsub.s32 0, %v237
  %v239 = vrot.slane %v234, %v238
  %v245 = vunpack.c.l.b16 %v230
  %v246 = vunpack.c.l.b16 %v231
  %v247 = vunpack.c.l.b16 %v232
  %v248 = vunpack.c.l.b16 %v233
  %v249 = vpack.c.b16 %v246, %v245
  %v250 = vpack.c.b16 %v248, %v247
  %v254 = vsel %vm59, %v229, 0
  %256 = vmatprep.subr.bf16.mxu0 0
  %257 = vmatpush1.bf16.msra.mxu0 %v249
  %258 = vmatprep.subr.bf16.mxu0 0
  %259 = vmatpush1.bf16.msra.mxu0 %v250
  %260 = vmatprep.subr.bf16.mxu0 0
  %261 = vmatpush1.bf16.msra.mxu0 0
  %262 = vmatprep.subr.bf16.mxu0 0
  %263 = vmatpush1.bf16.msra.mxu0 0
  %264 = vmatprep.subr.bf16.mxu0 0
  %265 = vmatpush1.bf16.msra.mxu0 0
  %266 = vmatprep.subr.bf16.mxu0 0
  %267 = vmatpush1.bf16.msra.mxu0 0
  %268 = vmatprep.subr.bf16.mxu0 0
  %269 = vmatpush1.bf16.msra.mxu0 0
  %270 = vmatprep.subr.bf16.mxu0 0
  %271 = vmatpush1.bf16.msra.mxu0 0
  %272 = vmatprep.subr.bf16.mxu0 0
  %273 = vmatpush1.bf16.msra.mxu0 0
  %274 = vmatprep.subr.bf16.mxu0 0
  %275 = vmatpush1.bf16.msra.mxu0 0
  %276 = vmatprep.subr.bf16.mxu0 0
  %277 = vmatpush1.bf16.msra.mxu0 0
  %278 = vmatprep.subr.bf16.mxu0 0
  %279 = vmatpush1.bf16.msra.mxu0 0
  %280 = vmatprep.subr.bf16.mxu0 0
  %281 = vmatpush1.bf16.msra.mxu0 0
  %282 = vmatprep.subr.bf16.mxu0 0
  %283 = vmatpush1.bf16.msra.mxu0 0
  %284 = vmatprep.subr.bf16.mxu0 0
  %285 = vmatpush1.bf16.msra.mxu0 0
  %286 = vmatprep.subr.bf16.mxu0 0
  %287 = vmatpush1.bf16.msra.mxu0 0
  %288 = vmatprep.mubr.bf16.mxu0 0
  %289 = vmatmul.mubr.bf16.gmra.mrb[0].mxu0 %v254
  %v290 = vpop.f32.mrb[0].mxu0
  %v291 = vadd.f32 %v239, %v290
  %v292 = vpop.f32.mrb[0].mxu0
  %v293 = vpop.f32.mrb[0].mxu0
  %v294 = vpop.f32.mrb[0].mxu0
  %295 = vdwg.mxu0
  %v296 = vmax.f32 %v291, 0.0
  %v297 = vpack.c.bf16 %v296, %v296
  %v298 = vld [vmem:[%s7] sm:$0xf]
  %v299 = vld [vmem:[%s7 + $0x4] sm:$0xf]
  %v300 = vld [vmem:[#allocation2] sm:$0x1]
  %v302 = vlaneseq
  %v303 = vshrl.u32 %v302, 7
  %v304 = vsub.s32 0, %v303
  %v305 = vrot.slane %v300, %v304
  %v309 = vunpack.c.l.b16 %v298
  %v310 = vunpack.c.l.b16 %v299
  %v311 = vpack.c.b16 %v310, %v309
  %vm313 = vcmask 130048
  %v315 = vsel %vm313, %v297, 0
  %317 = vmatprep.subr.bf16.mxu0 0
  %318 = vmatpush1.bf16.msra.mxu0 %v311
  %319 = vmatprep.subr.bf16.mxu0 0
  %320 = vmatpush1.bf16.msra.mxu0 0
  %321 = vmatprep.subr.bf16.mxu0 0
  %322 = vmatpush1.bf16.msra.mxu0 0
  %323 = vmatprep.subr.bf16.mxu0 0
  %324 = vmatpush1.bf16.msra.mxu0 0
  %325 = vmatprep.subr.bf16.mxu0 0
  %326 = vmatpush1.bf16.msra.mxu0 0
  %327 = vmatprep.subr.bf16.mxu0 0
  %328 = vmatpush1.bf16.msra.mxu0 0
  %329 = vmatprep.subr.bf16.mxu0 0
  %330 = vmatpush1.bf16.msra.mxu0 0
  %331 = vmatprep.subr.bf16.mxu0 0
  %332 = vmatpush1.bf16.msra.mxu0 0
  %333 = vmatprep.subr.bf16.mxu0 0
  %334 = vmatpush1.bf16.msra.mxu0 0
  %335 = vmatprep.subr.bf16.mxu0 0
  %336 = vmatpush1.bf16.msra.mxu0 0
  %337 = vmatprep.subr.bf16.mxu0 0
  %338 = vmatpush1.bf16.msra.mxu0 0
  %339 = vmatprep.subr.bf16.mxu0 0
  %340 = vmatpush1.bf16.msra.mxu0 0
  %341 = vmatprep.subr.bf16.mxu0 0
  %342 = vmatpush1.bf16.msra.mxu0 0
  %343 = vmatprep.subr.bf16.mxu0 0
  %344 = vmatpush1.bf16.msra.mxu0 0
  %345 = vmatprep.subr.bf16.mxu0 0
  %346 = vmatpush1.bf16.msra.mxu0 0
  %347 = vmatprep.subr.bf16.mxu0 0
  %348 = vmatpush1.bf16.msra.mxu0 0
  %349 = vmatprep.mubr.bf16.mxu0 0
  %350 = vmatmul.mubr.bf16.gmra.mrb[0].mxu0 %v315
  %v351 = vpop.f32.mrb[0].mxu0
  %v352 = vadd.f32 %v305, %v351
  %v353 = vpop.f32.mrb[0].mxu0
  %v354 = vpop.f32.mrb[0].mxu0
  %v355 = vpop.f32.mrb[0].mxu0
  %356 = vdwg.mxu0
  %vm357 = vcmask 7168
  %358 = vst.msk [vmem:[%s9] sm:$0xff] %vm357, %v352
  // Predicated region
  $region38: #{tpu_custom_call.1} parent=0 // pred_check
    _
  $region39: #{tpu_custom_call.1} parent=0 // pred_check_branch
    %360 = sbr.rel (0) target = $region41
  $region40: #{tpu_custom_call.1} parent=0 // pred_region
    _
  $region41: #{tpu_custom_call.1} parent=0 // pred_fallthru
    _
  // Predicated region
  $region42: #{tpu_custom_call.1} parent=0 // pred_check
    _
  $region43: #{tpu_custom_call.1} parent=0 // pred_check_branch
    %362 = sbr.rel (0) target = $region45
  $region44: #{tpu_custom_call.1} parent=0 // pred_region
    _
  $region45: #{tpu_custom_call.1} parent=0 // pred_fallthru
    _

// kernel: tpu_custom_call.1
$region0: #{tpu_custom_call.1}
  #allocation0 [shape = 'u32[]', space=smem, size = 0x4, offset = 0x4, fixed_abs, tag = 'smem constant byte address 0x4 - core index']
  #allocation1 [shape = 'u32[144,128]{1,0:T(1,128)}', space=vmem, size = 0x12000, scoped, tag = 'internal scratch']
  #allocation2 [shape = 'f32[1,1]{1,0:T(1,128)S(1)}', space=vmem, size = 0x200, scoped, tag = 'scoped memory for tpu_custom_call.1']
  %s0 = inlined_call_operand.vmem [shape: f32[8,32], index: 0, kind: input, shape index: {}]
  %s1 = inlined_call_operand.vmem [shape: f32[8,32], index: 1, kind: input, shape index: {}]
  %s2 = inlined_call_operand.vmem [shape: f32[8,32], index: 2, kind: input, shape index: {}]
  %s3 = inlined_call_operand.vmem [shape: bf16[96,32], index: 3, kind: input, shape index: {}]
  %s4 = inlined_call_operand.vmem [shape: f32[1,32], index: 4, kind: input, shape index: {}]
  %s5 = inlined_call_operand.vmem [shape: bf16[32,16], index: 5, kind: input, shape index: {}]
  %s6 = inlined_call_operand.vmem [shape: f32[1,16], index: 6, kind: input, shape index: {}]
  %s7 = inlined_call_operand.vmem [shape: bf16[16,1], index: 7, kind: input, shape index: {}]
  %s8 = inlined_call_operand.<no memory space> [shape: f32[1,1], index: 8, kind: input, shape index: {}]
  %s9 = inlined_call_operand.vmem [shape: f32[8,1], index: 9, kind: output, shape index: {}]
  %s10 = sld [smem:[#allocation0]]
  $region46: #{tpu_custom_call.1} parent=0
    _
  %s12 = ssub.s32 1, %s10
  %s13 = scalar_select 0, %s12, %s10
  %v14 = vstv %s8
  %15 = vst [vmem:[#allocation2] sm:$0x1] %v14
  // Predicated region
  $region2: #{tpu_custom_call.1} parent=0 // pred_check
    _
  $region3: #{tpu_custom_call.1} parent=0 // pred_check_branch
    %17 = sbr.rel (0) target = $region5
  $region4: #{tpu_custom_call.1} parent=0 // pred_region
    _
  $region5: #{tpu_custom_call.1} parent=0 // pred_fallthru
    _
  // Predicated region
  $region6: #{tpu_custom_call.1} parent=0 // pred_check
    _
  $region7: #{tpu_custom_call.1} parent=0 // pred_check_branch
    %19 = sbr.rel (0) target = $region9
  $region8: #{tpu_custom_call.1} parent=0 // pred_region
    _
  $region9: #{tpu_custom_call.1} parent=0 // pred_fallthru
    _
  // Predicated region
  $region10: #{tpu_custom_call.1} parent=0 // pred_check
    _
  $region11: #{tpu_custom_call.1} parent=0 // pred_check_branch
    %21 = sbr.rel (0) target = $region13
  $region12: #{tpu_custom_call.1} parent=0 // pred_region
    _
  $region13: #{tpu_custom_call.1} parent=0 // pred_fallthru
    _
  // Predicated region
  $region14: #{tpu_custom_call.1} parent=0 // pred_check
    _
  $region15: #{tpu_custom_call.1} parent=0 // pred_check_branch
    %23 = sbr.rel (0) target = $region17
  $region16: #{tpu_custom_call.1} parent=0 // pred_region
    _
  $region17: #{tpu_custom_call.1} parent=0 // pred_fallthru
    _
  // Predicated region
  $region18: #{tpu_custom_call.1} parent=0 // pred_check
    _
  $region19: #{tpu_custom_call.1} parent=0 // pred_check_branch
    %25 = sbr.rel (0) target = $region21
  $region20: #{tpu_custom_call.1} parent=0 // pred_region
    _
  $region21: #{tpu_custom_call.1} parent=0 // pred_fallthru
    _
  // Predicated region
  $region22: #{tpu_custom_call.1} parent=0 // pred_check
    _
  $region23: #{tpu_custom_call.1} parent=0 // pred_check_branch
    %27 = sbr.rel (0) target = $region25
  $region24: #{tpu_custom_call.1} parent=0 // pred_region
    _
  $region25: #{tpu_custom_call.1} parent=0 // pred_fallthru
    _
  // Predicated region
  $region26: #{tpu_custom_call.1} parent=0 // pred_check
    _
  $region27: #{tpu_custom_call.1} parent=0 // pred_check_branch
    %29 = sbr.rel (0) target = $region29
  $region28: #{tpu_custom_call.1} parent=0 // pred_region
    _
  $region29: #{tpu_custom_call.1} parent=0 // pred_fallthru
    _
  // Predicated region
  $region30: #{tpu_custom_call.1} parent=0 // pred_check
    _
  $region31: #{tpu_custom_call.1} parent=0 // pred_check_branch
    %31 = sbr.rel (0) target = $region33
  $region32: #{tpu_custom_call.1} parent=0 // pred_region
    _
  $region33: #{tpu_custom_call.1} parent=0 // pred_fallthru
    _
  // Predicated region
  $region34: #{tpu_custom_call.1} parent=0 // pred_check
    _
  $region35: #{tpu_custom_call.1} parent=0 // pred_check_branch
    %33 = sbr.rel (0) target = $region37
  $region36: #{tpu_custom_call.1} parent=0 // pred_region
    _
  $region37: #{tpu_custom_call.1} parent=0 // pred_fallthru
    _
  %v35 = vld [vmem:[%s0] sm:$0xff]
  %v36 = vpack.c.bf16 %v35, %v35
  %v37 = vld [vmem:[%s3] sm:$0xf]
  %v38 = vld [vmem:[%s3 + $0x4] sm:$0xf]
  %v39 = vld [vmem:[%s3 + $0x8] sm:$0xf]
  %v40 = vld [vmem:[%s3 + $0xc] sm:$0xf]
  %v41 = vld [vmem:[%s1] sm:$0xff]
  %v42 = vpack.c.bf16 %v41, %v41
  %v43 = vld [vmem:[%s3 + $0x10] sm:$0xf]
  %v44 = vld [vmem:[%s3 + $0x14] sm:$0xf]
  %v45 = vld [vmem:[%s3 + $0x18] sm:$0xf]
  %v46 = vld [vmem:[%s3 + $0x1c] sm:$0xf]
  %v51 = vunpack.c.l.b16 %v43
  %v52 = vunpack.c.l.b16 %v44
  %v53 = vunpack.c.l.b16 %v45
  %v54 = vunpack.c.l.b16 %v46
  %v55 = vpack.c.b16 %v52, %v51
  %v56 = vpack.c.b16 %v54, %v53
  %vm59 = vcmask 261120
  %v61 = vsel %vm59, %v42, 0
  %63 = vmatprep.subr.bf16.mxu0 0
  %64 = vmatpush1.bf16.msra.mxu0 %v55
  %65 = vmatprep.subr.bf16.mxu0 0
  %66 = vmatpush1.bf16.msra.mxu0 %v56
  %67 = vmatprep.subr.bf16.mxu0 0
  %68 = vmatpush1.bf16.msra.mxu0 0
  %69 = vmatprep.subr.bf16.mxu0 0
  %70 = vmatpush1.bf16.msra.mxu0 0
  %71 = vmatprep.subr.bf16.mxu0 0
  %72 = vmatpush1.bf16.msra.mxu0 0
  %73 = vmatprep.subr.bf16.mxu0 0
  %74 = vmatpush1.bf16.msra.mxu0 0
  %75 = vmatprep.subr.bf16.mxu0 0
  %76 = vmatpush1.bf16.msra.mxu0 0
  %77 = vmatprep.subr.bf16.mxu0 0
  %78 = vmatpush1.bf16.msra.mxu0 0
  %79 = vmatprep.subr.bf16.mxu0 0
  %80 = vmatpush1.bf16.msra.mxu0 0
  %81 = vmatprep.subr.bf16.mxu0 0
  %82 = vmatpush1.bf16.msra.mxu0 0
  %83 = vmatprep.subr.bf16.mxu0 0
  %84 = vmatpush1.bf16.msra.mxu0 0
  %85 = vmatprep.subr.bf16.mxu0 0
  %86 = vmatpush1.bf16.msra.mxu0 0
  %87 = vmatprep.subr.bf16.mxu0 0
  %88 = vmatpush1.bf16.msra.mxu0 0
  %89 = vmatprep.subr.bf16.mxu0 0
  %90 = vmatpush1.bf16.msra.mxu0 0
  %91 = vmatprep.subr.bf16.mxu0 0
  %92 = vmatpush1.bf16.msra.mxu0 0
  %93 = vmatprep.subr.bf16.mxu0 0
  %94 = vmatpush1.bf16.msra.mxu0 0
  %95 = vmatprep.mubr.bf16.mxu0 0
  %96 = vmatmul.mubr.bf16.gmra.mrb[0].mxu0 %v61
  %v97 = vpop.f32.mrb[0].mxu0
  %v98 = vadd.f32 0.0, %v97
  %v99 = vpop.f32.mrb[0].mxu0
  %v100 = vpop.f32.mrb[0].mxu0
  %v101 = vpop.f32.mrb[0].mxu0
  %102 = vdwg.mxu0
  %v107 = vunpack.c.l.b16 %v37
  %v108 = vunpack.c.l.b16 %v38
  %v109 = vunpack.c.l.b16 %v39
  %v110 = vunpack.c.l.b16 %v40
  %v111 = vpack.c.b16 %v108, %v107
  %v112 = vpack.c.b16 %v110, %v109
  %v116 = vsel %vm59, %v36, 0
  %118 = vmatprep.subr.bf16.mxu0 0
  %119 = vmatpush1.bf16.msra.mxu0 %v111
  %120 = vmatprep.subr.bf16.mxu0 0
  %121 = vmatpush1.bf16.msra.mxu0 %v112
  %122 = vmatprep.subr.bf16.mxu0 0
  %123 = vmatpush1.bf16.msra.mxu0 0
  %124 = vmatprep.subr.bf16.mxu0 0
  %125 = vmatpush1.bf16.msra.mxu0 0
  %126 = vmatprep.subr.bf16.mxu0 0
  %127 = vmatpush1.bf16.msra.mxu0 0
  %128 = vmatprep.subr.bf16.mxu0 0
  %129 = vmatpush1.bf16.msra.mxu0 0
  %130 = vmatprep.subr.bf16.mxu0 0
  %131 = vmatpush1.bf16.msra.mxu0 0
  %132 = vmatprep.subr.bf16.mxu0 0
  %133 = vmatpush1.bf16.msra.mxu0 0
  %134 = vmatprep.subr.bf16.mxu0 0
  %135 = vmatpush1.bf16.msra.mxu0 0
  %136 = vmatprep.subr.bf16.mxu0 0
  %137 = vmatpush1.bf16.msra.mxu0 0
  %138 = vmatprep.subr.bf16.mxu0 0
  %139 = vmatpush1.bf16.msra.mxu0 0
  %140 = vmatprep.subr.bf16.mxu0 0
  %141 = vmatpush1.bf16.msra.mxu0 0
  %142 = vmatprep.subr.bf16.mxu0 0
  %143 = vmatpush1.bf16.msra.mxu0 0
  %144 = vmatprep.subr.bf16.mxu0 0
  %145 = vmatpush1.bf16.msra.mxu0 0
  %146 = vmatprep.subr.bf16.mxu0 0
  %147 = vmatpush1.bf16.msra.mxu0 0
  %148 = vmatprep.subr.bf16.mxu0 0
  %149 = vmatpush1.bf16.msra.mxu0 0
  %150 = vmatprep.mubr.bf16.mxu0 0
  %151 = vmatmul.mubr.bf16.gmra.mrb[0].mxu0 %v116
  %v152 = vpop.f32.mrb[0].mxu0
  %v153 = vadd.f32 %v98, %v152
  %v154 = vpop.f32.mrb[0].mxu0
  %v155 = vpop.f32.mrb[0].mxu0
  %v156 = vpop.f32.mrb[0].mxu0
  %157 = vdwg.mxu0
  %v158 = vld [vmem:[%s2] sm:$0xff]
  %v159 = vpack.c.bf16 %v158, %v158
  %v160 = vld [vmem:[%s3 + $0x20] sm:$0xf]
  %v161 = vld [vmem:[%s3 + $0x24] sm:$0xf]
  %v162 = vld [vmem:[%s3 + $0x28] sm:$0xf]
  %v163 = vld [vmem:[%s3 + $0x2c] sm:$0xf]
  %v168 = vunpack.c.l.b16 %v160
  %v169 = vunpack.c.l.b16 %v161
  %v170 = vunpack.c.l.b16 %v162
  %v171 = vunpack.c.l.b16 %v163
  %v172 = vpack.c.b16 %v169, %v168
  %v173 = vpack.c.b16 %v171, %v170
  %v177 = vsel %vm59, %v159, 0
  %179 = vmatprep.subr.bf16.mxu0 0
  %180 = vmatpush1.bf16.msra.mxu0 %v172
  %181 = vmatprep.subr.bf16.mxu0 0
  %182 = vmatpush1.bf16.msra.mxu0 %v173
  %183 = vmatprep.subr.bf16.mxu0 0
  %184 = vmatpush1.bf16.msra.mxu0 0
  %185 = vmatprep.subr.bf16.mxu0 0
  %186 = vmatpush1.bf16.msra.mxu0 0
  %187 = vmatprep.subr.bf16.mxu0 0
  %188 = vmatpush1.bf16.msra.mxu0 0
  %189 = vmatprep.subr.bf16.mxu0 0
  %190 = vmatpush1.bf16.msra.mxu0 0
  %191 = vmatprep.subr.bf16.mxu0 0
  %192 = vmatpush1.bf16.msra.mxu0 0
  %193 = vmatprep.subr.bf16.mxu0 0
  %194 = vmatpush1.bf16.msra.mxu0 0
  %195 = vmatprep.subr.bf16.mxu0 0
  %196 = vmatpush1.bf16.msra.mxu0 0
  %197 = vmatprep.subr.bf16.mxu0 0
  %198 = vmatpush1.bf16.msra.mxu0 0
  %199 = vmatprep.subr.bf16.mxu0 0
  %200 = vmatpush1.bf16.msra.mxu0 0
  %201 = vmatprep.subr.bf16.mxu0 0
  %202 = vmatpush1.bf16.msra.mxu0 0
  %203 = vmatprep.subr.bf16.mxu0 0
  %204 = vmatpush1.bf16.msra.mxu0 0
  %205 = vmatprep.subr.bf16.mxu0 0
  %206 = vmatpush1.bf16.msra.mxu0 0
  %207 = vmatprep.subr.bf16.mxu0 0
  %208 = vmatpush1.bf16.msra.mxu0 0
  %209 = vmatprep.subr.bf16.mxu0 0
  %210 = vmatpush1.bf16.msra.mxu0 0
  %211 = vmatprep.mubr.bf16.mxu0 0
  %212 = vmatmul.mubr.bf16.gmra.mrb[0].mxu0 %v177
  %v213 = vpop.f32.mrb[0].mxu0
  %v214 = vadd.f32 0.0, %v213
  %v215 = vpop.f32.mrb[0].mxu0
  %v216 = vpop.f32.mrb[0].mxu0
  %v217 = vpop.f32.mrb[0].mxu0
  %218 = vdwg.mxu0
  %v219 = vadd.f32 %v153, %v214
  %v220 = vld [vmem:[%s4] sm:$0x1]
  %v222 = vlaneseq
  %v223 = vshrl.u32 %v222, 7
  %v224 = vsub.s32 0, %v223
  %v225 = vrot.slane %v220, %v224
  %v227 = vadd.f32 %v219, %v225
  %v228 = vmax.f32 %v227, 0.0
  %v229 = vpack.c.bf16 %v228, %v228
  %v230 = vld [vmem:[%s5] sm:$0xf]
  %v231 = vld [vmem:[%s5 + $0x4] sm:$0xf]
  %v232 = vld [vmem:[%s5 + $0x8] sm:$0xf]
  %v233 = vld [vmem:[%s5 + $0xc] sm:$0xf]
  %v234 = vld [vmem:[%s6] sm:$0x1]
  %v236 = vlaneseq
  %v237 = vshrl.u32 %v236, 7
  %v238 = vsub.s32 0, %v237
  %v239 = vrot.slane %v234, %v238
  %v245 = vunpack.c.l.b16 %v230
  %v246 = vunpack.c.l.b16 %v231
  %v247 = vunpack.c.l.b16 %v232
  %v248 = vunpack.c.l.b16 %v233
  %v249 = vpack.c.b16 %v246, %v245
  %v250 = vpack.c.b16 %v248, %v247
  %v254 = vsel %vm59, %v229, 0
  %256 = vmatprep.subr.bf16.mxu0 0
  %257 = vmatpush1.bf16.msra.mxu0 %v249
  %258 = vmatprep.subr.bf16.mxu0 0
  %259 = vmatpush1.bf16.msra.mxu0 %v250
  %260 = vmatprep.subr.bf16.mxu0 0
  %261 = vmatpush1.bf16.msra.mxu0 0
  %262 = vmatprep.subr.bf16.mxu0 0
  %263 = vmatpush1.bf16.msra.mxu0 0
  %264 = vmatprep.subr.bf16.mxu0 0
  %265 = vmatpush1.bf16.msra.mxu0 0
  %266 = vmatprep.subr.bf16.mxu0 0
  %267 = vmatpush1.bf16.msra.mxu0 0
  %268 = vmatprep.subr.bf16.mxu0 0
  %269 = vmatpush1.bf16.msra.mxu0 0
  %270 = vmatprep.subr.bf16.mxu0 0
  %271 = vmatpush1.bf16.msra.mxu0 0
  %272 = vmatprep.subr.bf16.mxu0 0
  %273 = vmatpush1.bf16.msra.mxu0 0
  %274 = vmatprep.subr.bf16.mxu0 0
  %275 = vmatpush1.bf16.msra.mxu0 0
  %276 = vmatprep.subr.bf16.mxu0 0
  %277 = vmatpush1.bf16.msra.mxu0 0
  %278 = vmatprep.subr.bf16.mxu0 0
  %279 = vmatpush1.bf16.msra.mxu0 0
  %280 = vmatprep.subr.bf16.mxu0 0
  %281 = vmatpush1.bf16.msra.mxu0 0
  %282 = vmatprep.subr.bf16.mxu0 0
  %283 = vmatpush1.bf16.msra.mxu0 0
  %284 = vmatprep.subr.bf16.mxu0 0
  %285 = vmatpush1.bf16.msra.mxu0 0
  %286 = vmatprep.subr.bf16.mxu0 0
  %287 = vmatpush1.bf16.msra.mxu0 0
  %288 = vmatprep.mubr.bf16.mxu0 0
  %289 = vmatmul.mubr.bf16.gmra.mrb[0].mxu0 %v254
  %v290 = vpop.f32.mrb[0].mxu0
  %v291 = vadd.f32 %v239, %v290
  %v292 = vpop.f32.mrb[0].mxu0
  %v293 = vpop.f32.mrb[0].mxu0
  %v294 = vpop.f32.mrb[0].mxu0
  %295 = vdwg.mxu0
  %v296 = vmax.f32 %v291, 0.0
  %v297 = vpack.c.bf16 %v296, %v296
  %v298 = vld [vmem:[%s7] sm:$0xf]
  %v299 = vld [vmem:[%s7 + $0x4] sm:$0xf]
  %v300 = vld [vmem:[#allocation2] sm:$0x1]
  %v302 = vlaneseq
  %v303 = vshrl.u32 %v302, 7
  %v304 = vsub.s32 0, %v303
  %v305 = vrot.slane %v300, %v304
  %v309 = vunpack.c.l.b16 %v298
  %v310 = vunpack.c.l.b16 %v299
  %v311 = vpack.c.b16 %v310, %v309
  %vm313 = vcmask 130048
  %v315 = vsel %vm313, %v297, 0
  %317 = vmatprep.subr.bf16.mxu0 0
  %318 = vmatpush1.bf16.msra.mxu0 %v311
  %319 = vmatprep.subr.bf16.mxu0 0
  %320 = vmatpush1.bf16.msra.mxu0 0
  %321 = vmatprep.subr.bf16.mxu0 0
  %322 = vmatpush1.bf16.msra.mxu0 0
  %323 = vmatprep.subr.bf16.mxu0 0
  %324 = vmatpush1.bf16.msra.mxu0 0
  %325 = vmatprep.subr.bf16.mxu0 0
  %326 = vmatpush1.bf16.msra.mxu0 0
  %327 = vmatprep.subr.bf16.mxu0 0
  %328 = vmatpush1.bf16.msra.mxu0 0
  %329 = vmatprep.subr.bf16.mxu0 0
  %330 = vmatpush1.bf16.msra.mxu0 0
  %331 = vmatprep.subr.bf16.mxu0 0
  %332 = vmatpush1.bf16.msra.mxu0 0
  %333 = vmatprep.subr.bf16.mxu0 0
  %334 = vmatpush1.bf16.msra.mxu0 0
  %335 = vmatprep.subr.bf16.mxu0 0
  %336 = vmatpush1.bf16.msra.mxu0 0
  %337 = vmatprep.subr.bf16.mxu0 0
  %338 = vmatpush1.bf16.msra.mxu0 0
  %339 = vmatprep.subr.bf16.mxu0 0
  %340 = vmatpush1.bf16.msra.mxu0 0
  %341 = vmatprep.subr.bf16.mxu0 0
  %342 = vmatpush1.bf16.msra.mxu0 0
  %343 = vmatprep.subr.bf16.mxu0 0
  %344 = vmatpush1.bf16.msra.mxu0 0
  %345 = vmatprep.subr.bf16.mxu0 0
  %346 = vmatpush1.bf16.msra.mxu0 0
  %347 = vmatprep.subr.bf16.mxu0 0
  %348 = vmatpush1.bf16.msra.mxu0 0
  %349 = vmatprep.mubr.bf16.mxu0 0
  %350 = vmatmul.mubr.bf16.gmra.mrb[0].mxu0 %v315
  %v351 = vpop.f32.mrb[0].mxu0
  %v352 = vadd.f32 %v305, %v351
  %v353 = vpop.f32.mrb[0].mxu0
  %v354 = vpop.f32.mrb[0].mxu0
  %v355 = vpop.f32.mrb[0].mxu0
  %356 = vdwg.mxu0
  %vm357 = vcmask 7168
  %358 = vst.msk [vmem:[%s9] sm:$0xff] %vm357, %v352
  // Predicated region
  $region38: #{tpu_custom_call.1} parent=0 // pred_check
    _
  $region39: #{tpu_custom_call.1} parent=0 // pred_check_branch
    %360 = sbr.rel (0) target = $region41
  $region40: #{tpu_custom_call.1} parent=0 // pred_region
    _
  $region41: #{tpu_custom_call.1} parent=0 // pred_fallthru
    _
  // Predicated region
  $region42: #{tpu_custom_call.1} parent=0 // pred_check
    _
  $region43: #{tpu_custom_call.1} parent=0 // pred_check_branch
    %362 = sbr.rel (0) target = $region45
  $region44: #{tpu_custom_call.1} parent=0 // pred_region
    _
  $region45: #{tpu_custom_call.1} parent=0 // pred_fallthru
    _

</llo_original>
